<compile_context>
chip_gen: v7x
topology: tpu7x:2x2x1
jax: 0.10.0
libtpu: 0.0.40
codegen_flags: <defaults>
</compile_context>

<pallas_src>
import functools
import math

import jax
import jax.numpy as jnp
from jax import lax
from jax.experimental import pallas as pl
from jax.experimental.pallas import tpu as pltpu


# --------------------------------------------------------------------------- #
# Helpers
# --------------------------------------------------------------------------- #
def _round_up(x, m):
    return ((x + m - 1) // m) * m


def _divisor_tiles_desc(total, quantum):
    """Multiples of `quantum` that divide `total` (itself a quantum multiple), descending."""
    units = total // quantum
    return [d * quantum for d in range(units, 0, -1) if units % d == 0]


def _device_kind():
    try:
        return jax.devices()[0].device_kind.lower()
    except Exception:  # pragma: no cover - defensive
        return ""


def _vmem_capacity_bytes():
    try:
        return int(pltpu.get_tpu_info().vmem_capacity_bytes)
    except Exception:  # pragma: no cover - defensive fallback (v7x per-core size)
        return 64 << 20


# --------------------------------------------------------------------------- #
# Kernel
# --------------------------------------------------------------------------- #
def _flatten_head_kernel(x_ref, w_ref, b_ref, o_ref, acc_ref):
    """One (tm, tn) output tile; K streamed on the innermost grid axis.

    x_ref  : (tm, tk)  activation tile (streams over M and K)
    w_ref  : (tn, tk)  weight tile kept in nn.Linear's (N, K) layout
    b_ref  : (1, tn)   f32 bias tile (follows the N grid index)
    o_ref  : (tm, tn)  output tile
    acc_ref: (tm, tn)  f32 scratch accumulator, resident across the K axis
    """
    k = pl.program_id(2)

    @pl.when(k == 0)
    def _():
        acc_ref[...] = jnp.zeros_like(acc_ref)

    # Contract X's K (axis 1) against W's K (axis 1): the transposed-RHS
    # contraction (x @ w.T) is MXU-native; no explicit weight transpose.
    acc_ref[...] += lax.dot_general(
        x_ref[...], w_ref[...],
        dimension_numbers=(((1,), (1,)), ((), ())),
        preferred_element_type=jnp.float32,
    )

    @pl.when(k == pl.num_programs(2) - 1)
    def _():
        # Bias added exactly once, in f32, then cast to the output dtype.
        o_ref[...] = (acc_ref[...] + b_ref[...]).astype(o_ref.dtype)
    # head_dropout = 0 -> Dropout is the identity in the forward pass.
    # TODO(synk): head_dropout > 0 in training mode would need pltpu PRNG masking.


# --------------------------------------------------------------------------- #
# Tile selection
# --------------------------------------------------------------------------- #
def _pick_tiles(M, K, N, in_bytes, out_bytes):
    kind = _device_kind()
    is_v5 = "v5" in kind
    is_v7 = "v7" in kind

    # Sublane packing of the compute dtype: f32 -> 8, bf16 -> 16, int8/fp8 -> 32.
    sub = {4: 8, 2: 16, 1: 32}.get(in_bytes, 8)

    capacity = _vmem_capacity_bytes()
    budget = int(0.70 * capacity)          # tile-resident budget with headroom

    # ---- M tile: full M when it fits, rounded to the packed sublane tile ---- #
    TM_CAP = 512
    M_sub = _round_up(M, sub)
    if M_sub <= TM_CAP:
        tm = M_sub
        if (not is_v5) and 128 < tm <= 256:
            tm = 256                        # v6e/v7x MXU is 256-wide
        M_pad = tm
    else:
        tm = TM_CAP
        M_pad = _round_up(M, tm)

    # ---- N tile: full lane-dense width -> X streamed from HBM exactly once -- #
    N_pad = _round_up(N, 128)
    tn = N_pad

    # ---- K: pad only to 128; tk must divide K_pad (no zero-pad DMA waste) --- #
    K_pad = _round_up(K, 128)
    TK_CAP = 512                            # keeps several pipelined K steps

    def vmem_bytes(tm_, tn_, tk_):
        return (2 * tm_ * tk_ * in_bytes    # X double buffer
                + 2 * tn_ * tk_ * in_bytes  # W double buffer
                + 2 * tn_ * 4               # bias double buffer (f32)
                + 2 * tm_ * tn_ * out_bytes # output double buffer
                + tm_ * tn_ * 4)            # f32 accumulator scratch

    def best_tk(tm_, tn_):
        for tk_ in _divisor_tiles_desc(K_pad, 128):
            if tk_ <= TK_CAP and vmem_bytes(tm_, tn_, tk_) <= budget:
                return tk_
        return None

    tk = best_tk(tm, tn)
    if tk is None:
        # Shrink the N tile to a divisor of N_pad (re-reads X, keeps W single-pass).
        for tn_c in _divisor_tiles_desc(N_pad, 128):
            tk = best_tk(tm, tn_c)
            if tk is not None:
                tn = tn_c
                break
    if tk is None:
        # Last-resort minimal tiles (never reached at FlattenHead shapes).
        tm = sub
        M_pad = _round_up(M, tm)
        tn, tk = 128, 128

    # ---- v7x megacore: give both TensorCores work when the grid is (1,1) ---- #
    # Splitting N duplicates only the small X stream; splitting M would
    # duplicate the dominant W stream, so never split M for this shape.
    if is_v7 and (M_pad // tm) * (N_pad // tn) == 1 and N_pad % 256 == 0:
        tn = N_pad // 2

    return tm, tk, tn, M_pad, K_pad, N_pad, capacity


# --------------------------------------------------------------------------- #
# Wrapper
# --------------------------------------------------------------------------- #
@functools.partial(jax.jit, static_argnames=("compute_dtype",))
def flatten_head_forward(x, weight, bias, *, compute_dtype=jnp.bfloat16):
    """FlattenHead forward.

    x:      (B, n_vars, d_model, patch_num)
    weight: (target_window, nf)  with nf = d_model * patch_num  (nn.Linear layout)
    bias:   (target_window,)
    returns (B, n_vars, target_window) in x's original dtype.
    """
    B, n_vars, d_model, patch_num = x.shape
    nf = d_model * patch_num
    target_window = weight.shape[0]
    assert weight.shape == (target_window, nf)

    out_dtype = x.dtype
    if compute_dtype is not None:
        x = x.astype(compute_dtype)            # no-op if already compute_dtype
        weight = weight.astype(compute_dtype)  # store params in bf16 to skip this

    # Flatten(start_dim=-2) -> (B, n_vars, nf); fold batch dims into rows.
    M, K, N = B * n_vars, nf, target_window
    x2d = x.reshape(M, K)

    in_bytes = jnp.dtype(x2d.dtype).itemsize
    out_bytes = jnp.dtype(out_dtype).itemsize

    tm, tk, tn, M_pad, K_pad, N_pad, capacity = _pick_tiles(M, K, N, in_bytes, out_bytes)

    # Zero-pad to tile multiples (zero K columns are exact; M/N pad is sliced off).
    if (M_pad, K_pad) != (M, K):
        x2d = jnp.pad(x2d, ((0, M_pad - M), (0, K_pad - K)))
    w = weight                                  # stays (N, K): no transpose copy
    if (N_pad, K_pad) != (N, K):
        w = jnp.pad(w, ((0, N_pad - N), (0, K_pad - K)))
    b2d = jnp.pad(bias.astype(jnp.float32), (0, N_pad - N)).reshape(1, N_pad)

    grid = (M_pad // tm, N_pad // tn, K_pad // tk)
    gi, gj, _ = grid

    # HBM traffic scaled by actual re-read factors (X per N tile, W per M tile).
    cost = pl.CostEstimate(
        flops=2 * M_pad * K_pad * N_pad,
        transcendentals=0,
        bytes_accessed=(gj * M_pad * K_pad * in_bytes
                        + gi * N_pad * K_pad * in_bytes
                        + M_pad * N_pad * out_bytes
                        + N_pad * 4),
    )

    # Generation-aware scoped-VMEM limit (~85% of physical, tiles sized to 70%).
    vmem_limit = int(min(capacity, max(int(0.85 * capacity), 32 << 20)))

    out = pl.pallas_call(
        _flatten_head_kernel,
        out_shape=jax.ShapeDtypeStruct((M_pad, N_pad), out_dtype),
        grid_spec=pltpu.PrefetchScalarGridSpec(
            num_scalar_prefetch=0,
            grid=grid,
            in_specs=[
                pl.BlockSpec((tm, tk), lambda i, j, k: (i, k)),   # X streams over M, K
                pl.BlockSpec((tn, tk), lambda i, j, k: (j, k)),   # W: independent of M
                pl.BlockSpec((1, tn), lambda i, j, k: (0, j)),    # bias follows N tile
            ],
            out_specs=pl.BlockSpec((tm, tn), lambda i, j, k: (i, j)),
            scratch_shapes=[pltpu.VMEM((tm, tn), jnp.float32)],
        ),
        compiler_params=pltpu.CompilerParams(
            # M/N tiles independent -> megacore-shardable; K is the reduction
            # axis (f32 accumulator lives across it).
            dimension_semantics=("parallel", "parallel", "arbitrary"),
            vmem_limit_bytes=vmem_limit,
        ),
        cost_estimate=cost,
    )(x2d, w, b2d)

    out = out[:M, :N]
    return out.reshape(B, n_vars, target_window)


# --------------------------------------------------------------------------- #
# Reference + self-test
# --------------------------------------------------------------------------- #
def _reference(x, weight, bias):
    B, n_vars, d_model, patch_num = x.shape
    x2 = x.reshape(B, n_vars, d_model * patch_num)
    return jnp.einsum("bvk,nk->bvn", x2, weight) + bias


if __name__ == "__main__":
    # Small shapes consistent with TimeLLM's FlattenHead usage:
    #   x is (B, n_vars, d_model, patch_num), nf = d_model * patch_num
    B, n_vars, d_model, patch_num = 2, 4, 16, 8
    nf = d_model * patch_num          # 128
    target_window = 32
    head_dropout = 0                  # identity at inference

    key = jax.random.PRNGKey(0)
    kx, kw, kb = jax.random.split(key, 3)

    x = jax.random.normal(kx, (B, n_vars, d_model, patch_num), dtype=jnp.float32)

    # Deterministic nn.Linear-style init: U(-1/sqrt(nf), 1/sqrt(nf))
    bound = 1.0 / math.sqrt(nf)
    weight = jax.random.uniform(kw, (target_window, nf), jnp.float32, -bound, bound)
    bias = jax.random.uniform(kb, (target_window,), jnp.float32, -bound, bound)

    y_ref = _reference(x, weight, bias)

    # Default path: bf16 compute with f32 accumulation (memory-bound win on all gens).
    y = jax.block_until_ready(flatten_head_forward(x, weight, bias))
    assert y.shape == (B, n_vars, target_window)
    assert y.dtype == x.dtype
    assert jnp.allclose(y, y_ref, atol=5e-2, rtol=5e-2)

    # f32 compute path (tight tolerance vs the reference).
    y32 = jax.block_until_ready(
        flatten_head_forward(x, weight, bias, compute_dtype=jnp.float32))
    assert y32.shape == (B, n_vars, target_window)
    assert jnp.allclose(y32, y_ref, atol=1e-5, rtol=1e-5)

    print("KERNEL_OK")
</pallas_src>

<mosaic_0001>
module attributes {stable_mosaic.version = 11 : i64} {
  func.func @_flatten_head_kernel(%arg0: i32, %arg1: i32, %arg2: i32, %arg3: memref<16x128xbf16, #tpu.memory_space<vmem>>, %arg4: memref<128x128xbf16, #tpu.memory_space<vmem>>, %arg5: memref<1x128xf32, #tpu.memory_space<vmem>>, %arg6: memref<16x128xf32, #tpu.memory_space<vmem>>, %arg7: memref<16x128xf32, #tpu.memory_space<vmem>>) attributes {dimension_semantics = [#tpu.dimension_semantics<parallel>, #tpu.dimension_semantics<parallel>, #tpu.dimension_semantics<arbitrary>], iteration_bounds = array<i64: 1, 1, 1>, scalar_prefetch = 0 : i64, scratch_operands = 1 : i64, tpu.core_type = #tpu.core_type<tc>, window_params = [{transform_indices = @transform_0, window_bounds = array<i64: 16, 128>}, {transform_indices = @transform_1, window_bounds = array<i64: 128, 128>}, {transform_indices = @transform_2, window_bounds = array<i64: 1, 128>}, {transform_indices = @transform_3, window_bounds = array<i64: 16, 128>}]} {
    %c0_i32 = arith.constant 0 : i32
    %0 = arith.cmpi eq, %arg2, %c0_i32 : i32
    %1 = arith.extui %0 : i1 to i32
    %c0_i32_0 = arith.constant 0 : i32
    %2 = arith.cmpi ne, %1, %c0_i32_0 : i32
    scf.if %2 {
      %cst_10 = arith.constant 0.000000e+00 : f32
      %12 = vector.broadcast %cst_10 : f32 to vector<16x128xf32>
      %c0_11 = arith.constant 0 : index
      %c0_12 = arith.constant 0 : index
      %13 = vector.load %arg7[%c0_11, %c0_12] : memref<16x128xf32, #tpu.memory_space<vmem>>, vector<16x128xf32>
      tpu.vector_store %arg7[%c0_11, %c0_12], %12 {strides = array<i32>} : memref<16x128xf32, #tpu.memory_space<vmem>>, vector<16x128xf32>,
    } else {
    }
    %c0 = arith.constant 0 : index
    %c0_1 = arith.constant 0 : index
    %3 = vector.load %arg7[%c0, %c0_1] : memref<16x128xf32, #tpu.memory_space<vmem>>, vector<16x128xf32>
    %c0_2 = arith.constant 0 : index
    %c0_3 = arith.constant 0 : index
    %4 = vector.load %arg3[%c0_2, %c0_3] : memref<16x128xbf16, #tpu.memory_space<vmem>>, vector<16x128xbf16>
    %c0_4 = arith.constant 0 : index
    %c0_5 = arith.constant 0 : index
    %5 = vector.load %arg4[%c0_4, %c0_5] : memref<128x128xbf16, #tpu.memory_space<vmem>>, vector<128x128xbf16>
    %cst = arith.constant dense<0.000000e+00> : vector<16x128xf32>
    %6 = tpu.matmul %4, %5, %cst {dimension_numbers = #tpu.dot_dimension_numbers<[1], [1], [0], [0], [0, 0, 1, 0], [], []>} : vector<16x128xbf16>, vector<128x128xbf16>, vector<16x128xf32> -> vector<16x128xf32>
    %7 = arith.addf %3, %6 : vector<16x128xf32>
    %c0_6 = arith.constant 0 : index
    %c0_7 = arith.constant 0 : index
    %8 = vector.load %arg7[%c0_6, %c0_7] : memref<16x128xf32, #tpu.memory_space<vmem>>, vector<16x128xf32>
    tpu.vector_store %arg7[%c0_6, %c0_7], %7 {strides = array<i32>} : memref<16x128xf32, #tpu.memory_space<vmem>>, vector<16x128xf32>,
    %c0_i32_8 = arith.constant 0 : i32
    %9 = arith.cmpi eq, %arg2, %c0_i32_8 : i32
    %10 = arith.extui %9 : i1 to i32
    %c0_i32_9 = arith.constant 0 : i32
    %11 = arith.cmpi ne, %10, %c0_i32_9 : i32
    scf.if %11 {
      %c0_10 = arith.constant 0 : index
      %c0_11 = arith.constant 0 : index
      %12 = vector.load %arg7[%c0_10, %c0_11] : memref<16x128xf32, #tpu.memory_space<vmem>>, vector<16x128xf32>
      %c0_12 = arith.constant 0 : index
      %c0_13 = arith.constant 0 : index
      %13 = vector.load %arg5[%c0_12, %c0_13] : memref<1x128xf32, #tpu.memory_space<vmem>>, vector<1x128xf32>
      %14 = vector.broadcast %13 : vector<1x128xf32> to vector<16x128xf32>
      %15 = arith.addf %12, %14 : vector<16x128xf32>
      %c0_14 = arith.constant 0 : index
      %c0_15 = arith.constant 0 : index
      %16 = vector.load %arg6[%c0_14, %c0_15] : memref<16x128xf32, #tpu.memory_space<vmem>>, vector<16x128xf32>
      tpu.vector_store %arg6[%c0_14, %c0_15], %15 {strides = array<i32>} : memref<16x128xf32, #tpu.memory_space<vmem>>, vector<16x128xf32>,
    } else {
    }
    return
  }
  func.func @transform_0(%arg0: i32, %arg1: i32, %arg2: i32) -> (i32, i32) {
    %c0_i32 = arith.constant 0 : i32
    return %arg0, %arg2 : i32, i32
  }
  func.func @transform_1(%arg0: i32, %arg1: i32, %arg2: i32) -> (i32, i32) {
    %c0_i32 = arith.constant 0 : i32
    return %arg1, %arg2 : i32, i32
  }
  func.func @transform_2(%arg0: i32, %arg1: i32, %arg2: i32) -> (i32, i32) {
    %c0_i32 = arith.constant 0 : i32
    %c0_i32_0 = arith.constant 0 : i32
    return %c0_i32, %arg1 : i32, i32
  }
  func.func @transform_3(%arg0: i32, %arg1: i32, %arg2: i32) -> (i32, i32) {
    %c0_i32 = arith.constant 0 : i32
    return %arg0, %arg1 : i32, i32
  }
}

</mosaic_0001>

<llo_original>
// kernel: flatten_head_forward.1
$region0: #{flatten_head_forward.1}
  #allocation0 [shape = 'u32[]', space=smem, size = 0x4, offset = 0x4, fixed_abs, tag = 'smem constant byte address 0x4 - core index']
  #allocation1 [shape = 'u32[144,128]{1,0:T(1,128)}', space=vmem, size = 0x12000, scoped, tag = 'internal scratch']
  #allocation2 [shape = 'f32[16,128]{1,0:T(8,128)}', space=vmem, size = 0x2000, scoped, tag = 'scratch operand']
  %s0 = inlined_call_operand.vmem [shape: bf16[16,128], index: 0, kind: input, shape index: {}]
  %s1 = inlined_call_operand.vmem [shape: bf16[128,128], index: 1, kind: input, shape index: {}]
  %s2 = inlined_call_operand.vmem [shape: f32[1,128], index: 2, kind: input, shape index: {}]
  %s3 = inlined_call_operand.vmem [shape: f32[16,128], index: 3, kind: output, shape index: {}]
  %s4 = sld [smem:[#allocation0]]
  $region30: #{flatten_head_forward.1} parent=0
    _
  %s6 = ssub.s32 1, %s4
  %s7 = scalar_select 0, %s6, %s4
  // Predicated region
  $region2: #{flatten_head_forward.1} parent=0 // pred_check
    _
  $region3: #{flatten_head_forward.1} parent=0 // pred_check_branch
    %9 = sbr.rel (0) target = $region5
  $region4: #{flatten_head_forward.1} parent=0 // pred_region
    _
  $region5: #{flatten_head_forward.1} parent=0 // pred_fallthru
    _
  // Predicated region
  $region6: #{flatten_head_forward.1} parent=0 // pred_check
    _
  $region7: #{flatten_head_forward.1} parent=0 // pred_check_branch
    %11 = sbr.rel (0) target = $region9
  $region8: #{flatten_head_forward.1} parent=0 // pred_region
    _
  $region9: #{flatten_head_forward.1} parent=0 // pred_fallthru
    _
  // Predicated region
  $region10: #{flatten_head_forward.1} parent=0 // pred_check
    _
  $region11: #{flatten_head_forward.1} parent=0 // pred_check_branch
    %13 = sbr.rel (0) target = $region13
  $region12: #{flatten_head_forward.1} parent=0 // pred_region
    _
  $region13: #{flatten_head_forward.1} parent=0 // pred_fallthru
    _
  %p15 = scmp.eq.s32.totalorder 0, 0
  // Predicated region
  $region14: #{flatten_head_forward.1} parent=0 // pred_check
    %p16 = pneg %p15
  $region15: #{flatten_head_forward.1} parent=0 // pred_check_branch
    %18 = sbr.rel (%p16) target = $region17
  $region16: #{flatten_head_forward.1} parent=0 // pred_region
    %19 = vst [vmem:[#allocation2] sm:$0xff] 0.0
    %20 = vst [vmem:[#allocation2 + $0x8] sm:$0xff] 0.0
  $region17: #{flatten_head_forward.1} parent=0 // pred_fallthru
    _
  %v21 = vld [vmem:[#allocation2] sm:$0xff]
  %v22 = vld [vmem:[#allocation2 + $0x8] sm:$0xff]
  %v23 = vld [vmem:[%s0] sm:$0xf]
  %v24 = vld [vmem:[%s0 + $0x4] sm:$0xf]
  %v25 = vld [vmem:[%s1] sm:$0xf]
  %v26 = vld [vmem:[%s1 + $0x4] sm:$0xf]
  %v27 = vld [vmem:[%s1 + $0x8] sm:$0xf]
  %v28 = vld [vmem:[%s1 + $0xc] sm:$0xf]
  %v29 = vld [vmem:[%s1 + $0x10] sm:$0xf]
  %v30 = vld [vmem:[%s1 + $0x14] sm:$0xf]
  %v31 = vld [vmem:[%s1 + $0x18] sm:$0xf]
  %v32 = vld [vmem:[%s1 + $0x1c] sm:$0xf]
  %v33 = vld [vmem:[%s1 + $0x20] sm:$0xf]
  %v34 = vld [vmem:[%s1 + $0x24] sm:$0xf]
  %v35 = vld [vmem:[%s1 + $0x28] sm:$0xf]
  %v36 = vld [vmem:[%s1 + $0x2c] sm:$0xf]
  %v37 = vld [vmem:[%s1 + $0x30] sm:$0xf]
  %v38 = vld [vmem:[%s1 + $0x34] sm:$0xf]
  %v39 = vld [vmem:[%s1 + $0x38] sm:$0xf]
  %v40 = vld [vmem:[%s1 + $0x3c] sm:$0xf]
  %v43 = vunpack.c.l.b16 %v23
  %v44 = vunpack.c.l.b16 %v24
  %v45 = vpack.c.b16 %v44, %v43
  %v63 = vunpack.c.l.b16 %v25
  %v64 = vunpack.c.l.b16 %v26
  %v65 = vunpack.c.l.b16 %v27
  %v66 = vunpack.c.l.b16 %v28
  %v67 = vunpack.c.l.b16 %v29
  %v68 = vunpack.c.l.b16 %v30
  %v69 = vunpack.c.l.b16 %v31
  %v70 = vunpack.c.l.b16 %v32
  %v71 = vunpack.c.l.b16 %v33
  %v72 = vunpack.c.l.b16 %v34
  %v73 = vunpack.c.l.b16 %v35
  %v74 = vunpack.c.l.b16 %v36
  %v75 = vunpack.c.l.b16 %v37
  %v76 = vunpack.c.l.b16 %v38
  %v77 = vunpack.c.l.b16 %v39
  %v78 = vunpack.c.l.b16 %v40
  %v79 = vpack.c.b16 %v64, %v63
  %v80 = vpack.c.b16 %v66, %v65
  %v81 = vpack.c.b16 %v68, %v67
  %v82 = vpack.c.b16 %v70, %v69
  %v83 = vpack.c.b16 %v72, %v71
  %v84 = vpack.c.b16 %v74, %v73
  %v85 = vpack.c.b16 %v76, %v75
  %v86 = vpack.c.b16 %v78, %v77
  %95 = vmatprep.subr.bf16.mxu0 0
  %96 = vmatpush1.bf16.xpose.msra.mxu0 %v79
  %97 = vmatprep.subr.bf16.mxu0 0
  %98 = vmatpush1.bf16.xpose.msra.mxu0 %v80
  %99 = vmatprep.subr.bf16.mxu0 0
  %100 = vmatpush1.bf16.xpose.msra.mxu0 %v81
  %101 = vmatprep.subr.bf16.mxu0 0
  %102 = vmatpush1.bf16.xpose.msra.mxu0 %v82
  %103 = vmatprep.subr.bf16.mxu0 0
  %104 = vmatpush1.bf16.xpose.msra.mxu0 %v83
  %105 = vmatprep.subr.bf16.mxu0 0
  %106 = vmatpush1.bf16.xpose.msra.mxu0 %v84
  %107 = vmatprep.subr.bf16.mxu0 0
  %108 = vmatpush1.bf16.xpose.msra.mxu0 %v85
  %109 = vmatprep.subr.bf16.mxu0 0
  %110 = vmatpush1.bf16.xpose.msra.mxu0 %v86
  %111 = vmatprep.subr.bf16.mxu0 0
  %112 = vmatpush1.bf16.xpose.msra.mxu0 0
  %113 = vmatprep.subr.bf16.mxu0 0
  %114 = vmatpush1.bf16.xpose.msra.mxu0 0
  %115 = vmatprep.subr.bf16.mxu0 0
  %116 = vmatpush1.bf16.xpose.msra.mxu0 0
  %117 = vmatprep.subr.bf16.mxu0 0
  %118 = vmatpush1.bf16.xpose.msra.mxu0 0
  %119 = vmatprep.subr.bf16.mxu0 0
  %120 = vmatpush1.bf16.xpose.msra.mxu0 0
  %121 = vmatprep.subr.bf16.mxu0 0
  %122 = vmatpush1.bf16.xpose.msra.mxu0 0
  %123 = vmatprep.subr.bf16.mxu0 0
  %124 = vmatpush1.bf16.xpose.msra.mxu0 0
  %125 = vmatprep.subr.bf16.mxu0 0
  %126 = vmatpush1.bf16.xpose.msra.mxu0 0
  %127 = vmatprep.mubr.bf16.mxu0 0
  %128 = vmatmul.mubr.bf16.gmra.mrb[0].mxu0 %v45
  %v129 = vpop.f32.mrb[0].mxu0
  %v130 = vadd.f32 0.0, %v129
  %v131 = vpop.f32.mrb[0].mxu0
  %v132 = vpop.f32.mrb[0].mxu0
  %v133 = vadd.f32 0.0, %v132
  %v134 = vpop.f32.mrb[0].mxu0
  %135 = vdwg.mxu0
  %v136 = vadd.f32 %v21, %v130
  %v137 = vadd.f32 %v22, %v133
  %138 = vst [vmem:[#allocation2] sm:$0xff] %v136
  %139 = vst [vmem:[#allocation2 + $0x8] sm:$0xff] %v137
  // Predicated region
  $region18: #{flatten_head_forward.1} parent=0 // pred_check
    %p140 = pneg %p15
  $region19: #{flatten_head_forward.1} parent=0 // pred_check_branch
    %142 = sbr.rel (%p140) target = $region21
  $region20: #{flatten_head_forward.1} parent=0 // pred_region
    %v143 = vld [vmem:[#allocation2] sm:$0xff]
    %v144 = vld [vmem:[#allocation2 + $0x8] sm:$0xff]
    %v145 = vld [vmem:[%s2] sm:$0x1]
    %v147 = vlaneseq
    %v148 = vshrl.u32 %v147, 7
    %v149 = vsub.s32 0, %v148
    %v150 = vrot.slane %v145, %v149
    %v152 = vadd.f32 %v143, %v150
    %v153 = vadd.f32 %v144, %v150
    %154 = vst [vmem:[%s3] sm:$0xff] %v152
    %155 = vst [vmem:[%s3 + $0x8] sm:$0xff] %v153
  $region21: #{flatten_head_forward.1} parent=0 // pred_fallthru
    _
  // Predicated region
  $region22: #{flatten_head_forward.1} parent=0 // pred_check
    _
  $region23: #{flatten_head_forward.1} parent=0 // pred_check_branch
    %157 = sbr.rel (0) target = $region25
  $region24: #{flatten_head_forward.1} parent=0 // pred_region
    _
  $region25: #{flatten_head_forward.1} parent=0 // pred_fallthru
    _
  // Predicated region
  $region26: #{flatten_head_forward.1} parent=0 // pred_check
    _
  $region27: #{flatten_head_forward.1} parent=0 // pred_check_branch
    %159 = sbr.rel (0) target = $region29
  $region28: #{flatten_head_forward.1} parent=0 // pred_region
    _
  $region29: #{flatten_head_forward.1} parent=0 // pred_fallthru
    _

</llo_original>
